<compile_context>
chip_gen: v6e
topology: v6e:2x2x1
jax: 0.10.0
libtpu: 0.0.40
codegen_flags: <defaults>
</compile_context>

<pallas_src>
import functools

import jax
import jax.numpy as jnp
from jax.experimental import pallas as pl
from jax.experimental.pallas import tpu as pltpu


# ---------------------------------------------------------------------------
# Kernel
# ---------------------------------------------------------------------------
def _p2s_kernel(x_ref, w1_ref, b1_ref, w2_ref, b2_ref, wo_ref, bo_ref, out_ref):
    cdt = w1_ref.dtype  # compute dtype of the matmul operands (f32 or bf16)

    x = x_ref[...]

    # y = relu(fc1(x))
    y = jnp.dot(x, w1_ref[...], preferred_element_type=jnp.float32) + b1_ref[...]
    y = jnp.maximum(y, 0.0).astype(cdt)

    # y = relu(fc2(y))  applied twice, matching the PyTorch forward.
    w2 = w2_ref[...]
    b2 = b2_ref[...]
    y = jnp.dot(y, w2, preferred_element_type=jnp.float32) + b2
    y = jnp.maximum(y, 0.0).astype(cdt)
    y = jnp.dot(y, w2, preferred_element_type=jnp.float32) + b2
    y = jnp.maximum(y, 0.0).astype(cdt)

    # out = self.out(y)
    out = jnp.dot(y, wo_ref[...], preferred_element_type=jnp.float32) + bo_ref[...]
    out_ref[...] = out.astype(out_ref.dtype)


# ---------------------------------------------------------------------------
# Wrapper
# ---------------------------------------------------------------------------
def _round_up(n, m):
    return ((n + m - 1) // m) * m


def _pad2d(a, rows, cols):
    return jnp.pad(a, ((0, rows - a.shape[0]), (0, cols - a.shape[1])))


@functools.partial(jax.jit, static_argnames=("use_bf16", "tile_b_max"))
def p2s_forward(x, params, *, use_bf16=False, tile_b_max=1024):
    """Fused MLP forward in a single Pallas kernel, tiled over the batch axis.

    x: (B, input_dim) float32
    params: dict with w1 (in,100), b1 (1,100), w2 (100,100), b2 (1,100),
            wo (100,out), bo (1,out)   -- all float32, layout (in, out) so the
            kernel computes x @ W + b (== PyTorch's x @ W.T + b).
    """
    B, in_dim = x.shape
    hid_dim = params["w2"].shape[0]
    out_dim = params["wo"].shape[1]

    # --- lane-dense padding of every feature axis ---------------------------
    in_p = _round_up(in_dim, 128)
    hid_p = _round_up(hid_dim, 128)
    out_p = _round_up(out_dim, 128)

    # Batch tiling: (8,128)-aligned row tiles, capped for VMEM safety.
    # A 1024x128 f32 tile is 512 KiB; with double-buffered x/out plus
    # intermediates we stay well under the 32 MiB scoped VMEM default.
    tile_b = min(tile_b_max, _round_up(B, 8))
    b_pad = _round_up(B, tile_b)

    cdt = jnp.bfloat16 if use_bf16 else jnp.float32

    x_p = _pad2d(x, b_pad, in_p).astype(cdt)
    w1 = _pad2d(params["w1"], in_p, hid_p).astype(cdt)
    b1 = _pad2d(params["b1"], 1, hid_p)                 # biases stay f32
    w2 = _pad2d(params["w2"], hid_p, hid_p).astype(cdt)
    b2 = _pad2d(params["b2"], 1, hid_p)
    wo = _pad2d(params["wo"], hid_p, out_p).astype(cdt)
    bo = _pad2d(params["bo"], 1, out_p)

    grid = (b_pad // tile_b,)

    # Weights/biases: full arrays, same block every grid step -> VMEM-resident.
    resident = lambda a: pl.BlockSpec(a.shape, lambda i: (0,) * a.ndim)

    elem_bytes = 2 if use_bf16 else 4
    cost = pl.CostEstimate(
        flops=2 * b_pad * (in_p * hid_p + 2 * hid_p * hid_p + hid_p * out_p),
        transcendentals=0,
        bytes_accessed=(
            b_pad * in_p * elem_bytes                      # x
            + b_pad * out_p * 4                            # out (f32)
            + (in_p * hid_p + hid_p * hid_p + hid_p * out_p) * elem_bytes
            + (2 * hid_p + out_p) * 4                      # biases
        ),
    )

    out_padded = pl.pallas_call(
        _p2s_kernel,
        out_shape=jax.ShapeDtypeStruct((b_pad, out_p), jnp.float32),
        grid_spec=pltpu.PrefetchScalarGridSpec(
            num_scalar_prefetch=0,
            grid=grid,
            in_specs=[
                pl.BlockSpec((tile_b, in_p), lambda i: (i, 0)),   # x tile
                resident(w1), resident(b1),
                resident(w2), resident(b2),
                resident(wo), resident(bo),
            ],
            out_specs=pl.BlockSpec((tile_b, out_p), lambda i: (i, 0)),
        ),
        compiler_params=pltpu.CompilerParams(
            dimension_semantics=("parallel",),   # v7x: shard batch across TCs
        ),
        cost_estimate=cost,
    )(x_p, w1, b1, w2, b2, wo, bo)

    return out_padded[:B, :out_dim]


# ---------------------------------------------------------------------------
# Params / reference
# ---------------------------------------------------------------------------
def init_params(key, input_dim=36, hidden=100, output_dim=100):
    """Deterministic synthetic parameters (PyTorch-Linear-like uniform init)."""
    ks = jax.random.split(key, 8)

    def linear(kw, kb, fan_in, fan_out):
        bound = 1.0 / jnp.sqrt(fan_in)
        w = jax.random.uniform(kw, (fan_in, fan_out), jnp.float32, -bound, bound)
        b = jax.random.uniform(kb, (1, fan_out), jnp.float32, -bound, bound)
        return w, b

    w1, b1 = linear(ks[0], ks[1], input_dim, hidden)
    w2, b2 = linear(ks[2], ks[3], hidden, hidden)
    # fc3 exists in the PyTorch __init__ but is unused in forward; not materialized.
    wo, bo = linear(ks[6], ks[7], hidden, output_dim)
    return {"w1": w1, "b1": b1, "w2": w2, "b2": b2, "wo": wo, "bo": bo}


def p2s_reference(x, p):
    y = jnp.maximum(x @ p["w1"] + p["b1"], 0.0)
    y = jnp.maximum(y @ p["w2"] + p["b2"], 0.0)
    y = jnp.maximum(y @ p["w2"] + p["b2"], 0.0)
    return y @ p["wo"] + p["bo"]


# ---------------------------------------------------------------------------
# Demo / self-test
# ---------------------------------------------------------------------------
if __name__ == "__main__":
    key = jax.random.PRNGKey(0)
    k_x, k_p = jax.random.split(key)

    batch, input_dim, output_dim = 8, 36, 100
    x = jax.random.normal(k_x, (batch, input_dim), jnp.float32)
    params = init_params(k_p, input_dim=input_dim, hidden=100, output_dim=output_dim)

    out = p2s_forward(x, params)           # f32 path: tight tolerance
    out = jax.block_until_ready(out)

    ref = p2s_reference(x, params)
    assert out.shape == (batch, output_dim)
    assert jnp.allclose(out, ref, atol=1e-4, rtol=1e-4), "mismatch vs reference (f32)"

    # Optional bf16 operand path (f32 accumulation) — looser tolerance.
    out_bf16 = jax.block_until_ready(p2s_forward(x, params, use_bf16=True))
    assert jnp.allclose(out_bf16, ref, atol=5e-2, rtol=5e-2), "mismatch vs reference (bf16)"

    print("KERNEL_OK")
</pallas_src>

<mosaic_0001>
module attributes {stable_mosaic.version = 11 : i64} {
  func.func @_p2s_kernel(%arg0: i32, %arg1: memref<8x128xf32, #tpu.memory_space<vmem>>, %arg2: memref<128x128xf32, #tpu.memory_space<vmem>>, %arg3: memref<1x128xf32, #tpu.memory_space<vmem>>, %arg4: memref<128x128xf32, #tpu.memory_space<vmem>>, %arg5: memref<1x128xf32, #tpu.memory_space<vmem>>, %arg6: memref<128x128xf32, #tpu.memory_space<vmem>>, %arg7: memref<1x128xf32, #tpu.memory_space<vmem>>, %arg8: memref<8x128xf32, #tpu.memory_space<vmem>>) attributes {dimension_semantics = [#tpu.dimension_semantics<parallel>], iteration_bounds = array<i64: 1>, scalar_prefetch = 0 : i64, scratch_operands = 0 : i64, tpu.core_type = #tpu.core_type<tc>, window_params = [{transform_indices = @transform_0, window_bounds = array<i64: 8, 128>}, {pipeline_mode = #tpu.pipeline_mode<synchronous>, transform_indices = @transform_1, window_bounds = array<i64: 128, 128>}, {pipeline_mode = #tpu.pipeline_mode<synchronous>, transform_indices = @transform_2, window_bounds = array<i64: 1, 128>}, {pipeline_mode = #tpu.pipeline_mode<synchronous>, transform_indices = @transform_3, window_bounds = array<i64: 128, 128>}, {pipeline_mode = #tpu.pipeline_mode<synchronous>, transform_indices = @transform_4, window_bounds = array<i64: 1, 128>}, {pipeline_mode = #tpu.pipeline_mode<synchronous>, transform_indices = @transform_5, window_bounds = array<i64: 128, 128>}, {pipeline_mode = #tpu.pipeline_mode<synchronous>, transform_indices = @transform_6, window_bounds = array<i64: 1, 128>}, {transform_indices = @transform_7, window_bounds = array<i64: 8, 128>}]} {
    %c0 = arith.constant 0 : index
    %c0_0 = arith.constant 0 : index
    %0 = vector.load %arg1[%c0, %c0_0] : memref<8x128xf32, #tpu.memory_space<vmem>>, vector<8x128xf32>
    %c0_1 = arith.constant 0 : index
    %c0_2 = arith.constant 0 : index
    %1 = vector.load %arg2[%c0_1, %c0_2] : memref<128x128xf32, #tpu.memory_space<vmem>>, vector<128x128xf32>
    %cst = arith.constant dense<0.000000e+00> : vector<8x128xf32>
    %2 = tpu.matmul %0, %1, %cst {dimension_numbers = #tpu.dot_dimension_numbers<[1], [0], [0], [1], [0, 0, 1, 1], [], []>} : vector<8x128xf32>, vector<128x128xf32>, vector<8x128xf32> -> vector<8x128xf32>
    %c0_3 = arith.constant 0 : index
    %c0_4 = arith.constant 0 : index
    %3 = vector.load %arg3[%c0_3, %c0_4] : memref<1x128xf32, #tpu.memory_space<vmem>>, vector<1x128xf32>
    %4 = vector.broadcast %3 : vector<1x128xf32> to vector<8x128xf32>
    %5 = arith.addf %2, %4 : vector<8x128xf32>
    %cst_5 = arith.constant 0.000000e+00 : f32
    %6 = vector.broadcast %cst_5 : f32 to vector<8x128xf32>
    %7 = arith.maximumf %5, %6 : vector<8x128xf32>
    %c0_6 = arith.constant 0 : index
    %c0_7 = arith.constant 0 : index
    %8 = vector.load %arg4[%c0_6, %c0_7] : memref<128x128xf32, #tpu.memory_space<vmem>>, vector<128x128xf32>
    %c0_8 = arith.constant 0 : index
    %c0_9 = arith.constant 0 : index
    %9 = vector.load %arg5[%c0_8, %c0_9] : memref<1x128xf32, #tpu.memory_space<vmem>>, vector<1x128xf32>
    %cst_10 = arith.constant dense<0.000000e+00> : vector<8x128xf32>
    %10 = tpu.matmul %7, %8, %cst_10 {dimension_numbers = #tpu.dot_dimension_numbers<[1], [0], [0], [1], [0, 0, 1, 1], [], []>} : vector<8x128xf32>, vector<128x128xf32>, vector<8x128xf32> -> vector<8x128xf32>
    %11 = vector.broadcast %9 : vector<1x128xf32> to vector<8x128xf32>
    %12 = arith.addf %10, %11 : vector<8x128xf32>
    %cst_11 = arith.constant 0.000000e+00 : f32
    %13 = vector.broadcast %cst_11 : f32 to vector<8x128xf32>
    %14 = arith.maximumf %12, %13 : vector<8x128xf32>
    %cst_12 = arith.constant dense<0.000000e+00> : vector<8x128xf32>
    %15 = tpu.matmul %14, %8, %cst_12 {dimension_numbers = #tpu.dot_dimension_numbers<[1], [0], [0], [1], [0, 0, 1, 1], [], []>} : vector<8x128xf32>, vector<128x128xf32>, vector<8x128xf32> -> vector<8x128xf32>
    %16 = vector.broadcast %9 : vector<1x128xf32> to vector<8x128xf32>
    %17 = arith.addf %15, %16 : vector<8x128xf32>
    %cst_13 = arith.constant 0.000000e+00 : f32
    %18 = vector.broadcast %cst_13 : f32 to vector<8x128xf32>
    %19 = arith.maximumf %17, %18 : vector<8x128xf32>
    %c0_14 = arith.constant 0 : index
    %c0_15 = arith.constant 0 : index
    %20 = vector.load %arg6[%c0_14, %c0_15] : memref<128x128xf32, #tpu.memory_space<vmem>>, vector<128x128xf32>
    %cst_16 = arith.constant dense<0.000000e+00> : vector<8x128xf32>
    %21 = tpu.matmul %19, %20, %cst_16 {dimension_numbers = #tpu.dot_dimension_numbers<[1], [0], [0], [1], [0, 0, 1, 1], [], []>} : vector<8x128xf32>, vector<128x128xf32>, vector<8x128xf32> -> vector<8x128xf32>
    %c0_17 = arith.constant 0 : index
    %c0_18 = arith.constant 0 : index
    %22 = vector.load %arg7[%c0_17, %c0_18] : memref<1x128xf32, #tpu.memory_space<vmem>>, vector<1x128xf32>
    %23 = vector.broadcast %22 : vector<1x128xf32> to vector<8x128xf32>
    %24 = arith.addf %21, %23 : vector<8x128xf32>
    %c0_19 = arith.constant 0 : index
    %c0_20 = arith.constant 0 : index
    %25 = vector.load %arg8[%c0_19, %c0_20] : memref<8x128xf32, #tpu.memory_space<vmem>>, vector<8x128xf32>
    tpu.vector_store %arg8[%c0_19, %c0_20], %24 {strides = array<i32>} : memref<8x128xf32, #tpu.memory_space<vmem>>, vector<8x128xf32>,
    return
  }
  func.func @transform_0(%arg0: i32) -> (i32, i32) {
    %c0_i32 = arith.constant 0 : i32
    %c0_i32_0 = arith.constant 0 : i32
    return %arg0, %c0_i32 : i32, i32
  }
  func.func @transform_1(%arg0: i32) -> (i32, i32) {
    %c0_i32 = arith.constant 0 : i32
    %c0_i32_0 = arith.constant 0 : i32
    %c0_i32_1 = arith.constant 0 : i32
    return %c0_i32, %c0_i32_0 : i32, i32
  }
  func.func @transform_2(%arg0: i32) -> (i32, i32) {
    %c0_i32 = arith.constant 0 : i32
    %c0_i32_0 = arith.constant 0 : i32
    %c0_i32_1 = arith.constant 0 : i32
    return %c0_i32, %c0_i32_0 : i32, i32
  }
  func.func @transform_3(%arg0: i32) -> (i32, i32) {
    %c0_i32 = arith.constant 0 : i32
    %c0_i32_0 = arith.constant 0 : i32
    %c0_i32_1 = arith.constant 0 : i32
    return %c0_i32, %c0_i32_0 : i32, i32
  }
  func.func @transform_4(%arg0: i32) -> (i32, i32) {
    %c0_i32 = arith.constant 0 : i32
    %c0_i32_0 = arith.constant 0 : i32
    %c0_i32_1 = arith.constant 0 : i32
    return %c0_i32, %c0_i32_0 : i32, i32
  }
  func.func @transform_5(%arg0: i32) -> (i32, i32) {
    %c0_i32 = arith.constant 0 : i32
    %c0_i32_0 = arith.constant 0 : i32
    %c0_i32_1 = arith.constant 0 : i32
    return %c0_i32, %c0_i32_0 : i32, i32
  }
  func.func @transform_6(%arg0: i32) -> (i32, i32) {
    %c0_i32 = arith.constant 0 : i32
    %c0_i32_0 = arith.constant 0 : i32
    %c0_i32_1 = arith.constant 0 : i32
    return %c0_i32, %c0_i32_0 : i32, i32
  }
  func.func @transform_7(%arg0: i32) -> (i32, i32) {
    %c0_i32 = arith.constant 0 : i32
    %c0_i32_0 = arith.constant 0 : i32
    return %arg0, %c0_i32 : i32, i32
  }
}

</mosaic_0001>

<llo_original>
// kernel: p2s_forward.1
$region0: #{p2s_forward.1}
  #allocation0 [shape = 'u32[]', space=smem, size = 0x4, offset = 0x4, fixed_abs, tag = 'smem constant byte address 0x4 - core index']
  #allocation1 [shape = 'u32[144,128]{1,0:T(1,128)}', space=vmem, size = 0x12000, scoped, tag = 'internal scratch']
  %s0 = inlined_call_operand.vmem [shape: f32[8,128], index: 0, kind: input, shape index: {}]
  %s1 = inlined_call_operand.vmem [shape: f32[128,128], index: 1, kind: input, shape index: {}]
  %s2 = inlined_call_operand.vmem [shape: f32[1,128], index: 2, kind: input, shape index: {}]
  %s3 = inlined_call_operand.vmem [shape: f32[128,128], index: 3, kind: input, shape index: {}]
  %s4 = inlined_call_operand.vmem [shape: f32[1,128], index: 4, kind: input, shape index: {}]
  %s5 = inlined_call_operand.vmem [shape: f32[128,128], index: 5, kind: input, shape index: {}]
  %s6 = inlined_call_operand.vmem [shape: f32[1,128], index: 6, kind: input, shape index: {}]
  %s7 = inlined_call_operand.hbm [shape: f32[8,128], index: 7, kind: output, shape index: {}]
  %s8 = sld [smem:[#allocation0]]
  $region38: #{p2s_forward.1} parent=0
    _
  %s10 = ssub.s32 1, %s8
  %s11 = scalar_select 0, %s10, %s8
  $region1: #{p2s_forward.1} parent=0
    #allocation2 [shape = 'u8[4096]{0}', space=vmem, size = 0x1000, scoped, tag = 'output window, operand 0, single buffered']
    #allocation3 [shape = 's32[1]{0}', space=sflag, size = 0x4, scoped, tag = 'scoped memory for p2s_forward.1']
    %12 = vsyncpa [#allocation3], 0
    // Predicated region
    $region2: #{p2s_forward.1} parent=1 // pred_check
      _
    $region3: #{p2s_forward.1} parent=1 // pred_check_branch
      %14 = sbr.rel (0) target = $region5
    $region4: #{p2s_forward.1} parent=1 // pred_region
      _
    $region5: #{p2s_forward.1} parent=1 // pred_fallthru
      _
    // Predicated region
    $region6: #{p2s_forward.1} parent=1 // pred_check
      _
    $region7: #{p2s_forward.1} parent=1 // pred_check_branch
      %16 = sbr.rel (0) target = $region9
    $region8: #{p2s_forward.1} parent=1 // pred_region
      _
    $region9: #{p2s_forward.1} parent=1 // pred_fallthru
      _
    // Predicated region
    $region10: #{p2s_forward.1} parent=1 // pred_check
      _
    $region11: #{p2s_forward.1} parent=1 // pred_check_branch
      %18 = sbr.rel (0) target = $region13
    $region12: #{p2s_forward.1} parent=1 // pred_region
      _
    $region13: #{p2s_forward.1} parent=1 // pred_fallthru
      _
    // Predicated region
    $region14: #{p2s_forward.1} parent=1 // pred_check
      _
    $region15: #{p2s_forward.1} parent=1 // pred_check_branch
      %20 = sbr.rel (0) target = $region17
    $region16: #{p2s_forward.1} parent=1 // pred_region
      _
    $region17: #{p2s_forward.1} parent=1 // pred_fallthru
      _
    // Predicated region
    $region18: #{p2s_forward.1} parent=1 // pred_check
      _
    $region19: #{p2s_forward.1} parent=1 // pred_check_branch
      %22 = sbr.rel (0) target = $region21
    $region20: #{p2s_forward.1} parent=1 // pred_region
      _
    $region21: #{p2s_forward.1} parent=1 // pred_fallthru
      _
    // Predicated region
    $region22: #{p2s_forward.1} parent=1 // pred_check
      _
    $region23: #{p2s_forward.1} parent=1 // pred_check_branch
      %24 = sbr.rel (0) target = $region25
    $region24: #{p2s_forward.1} parent=1 // pred_region
      _
    $region25: #{p2s_forward.1} parent=1 // pred_fallthru
      _
    // Predicated region
    $region26: #{p2s_forward.1} parent=1 // pred_check
      _
    $region27: #{p2s_forward.1} parent=1 // pred_check_branch
      %26 = sbr.rel (0) target = $region29
    $region28: #{p2s_forward.1} parent=1 // pred_region
      _
    $region29: #{p2s_forward.1} parent=1 // pred_fallthru
      _
    %v27 = vld [vmem:[%s0] sm:$0xff]
    %v28 = vld [vmem:[%s1] sm:$0xff]
    %v29 = vld [vmem:[%s1 + $0x8] sm:$0xff]
    %v30 = vld [vmem:[%s1 + $0x10] sm:$0xff]
    %v31 = vld [vmem:[%s1 + $0x18] sm:$0xff]
    %v32 = vld [vmem:[%s1 + $0x20] sm:$0xff]
    %v33 = vld [vmem:[%s1 + $0x28] sm:$0xff]
    %v34 = vld [vmem:[%s1 + $0x30] sm:$0xff]
    %v35 = vld [vmem:[%s1 + $0x38] sm:$0xff]
    %v36 = vld [vmem:[%s1 + $0x40] sm:$0xff]
    %v37 = vld [vmem:[%s1 + $0x48] sm:$0xff]
    %v38 = vld [vmem:[%s1 + $0x50] sm:$0xff]
    %v39 = vld [vmem:[%s1 + $0x58] sm:$0xff]
    %v40 = vld [vmem:[%s1 + $0x60] sm:$0xff]
    %v41 = vld [vmem:[%s1 + $0x68] sm:$0xff]
    %v42 = vld [vmem:[%s1 + $0x70] sm:$0xff]
    %v43 = vld [vmem:[%s1 + $0x78] sm:$0xff]
    %v44 = vld [vmem:[%s2] sm:$0x1]
    %v46 = vlaneseq
    %v47 = vshrl.u32 %v46, 7
    %v48 = vsub.s32 0, %v47
    %v49 = vrot.slane %v44, %v48
    %51 = vmatprep.subr.mxu0 0.0
    %52 = vmatpush1.msra.mxu0 %v43
    %53 = vmatprep.subr.mxu0 0.0
    %54 = vmatpush1.msra.mxu0 %v42
    %55 = vmatprep.subr.mxu0 0.0
    %56 = vmatpush1.msra.mxu0 %v41
    %57 = vmatprep.subr.mxu0 0.0
    %58 = vmatpush1.msra.mxu0 %v40
    %59 = vmatprep.subr.mxu0 0.0
    %60 = vmatpush1.msra.mxu0 %v39
    %61 = vmatprep.subr.mxu0 0.0
    %62 = vmatpush1.msra.mxu0 %v38
    %63 = vmatprep.subr.mxu0 0.0
    %64 = vmatpush1.msra.mxu0 %v37
    %65 = vmatprep.subr.mxu0 0.0
    %66 = vmatpush1.msra.mxu0 %v36
    %67 = vmatprep.subr.mxu0 0.0
    %68 = vmatpush1.msra.mxu0 %v35
    %69 = vmatprep.subr.mxu0 0.0
    %70 = vmatpush1.msra.mxu0 %v34
    %71 = vmatprep.subr.mxu0 0.0
    %72 = vmatpush1.msra.mxu0 %v33
    %73 = vmatprep.subr.mxu0 0.0
    %74 = vmatpush1.msra.mxu0 %v32
    %75 = vmatprep.subr.mxu0 0.0
    %76 = vmatpush1.msra.mxu0 %v31
    %77 = vmatprep.subr.mxu0 0.0
    %78 = vmatpush1.msra.mxu0 %v30
    %79 = vmatprep.subr.mxu0 0.0
    %80 = vmatpush1.msra.mxu0 %v29
    %81 = vmatprep.subr.mxu0 0.0
    %82 = vmatpush1.msra.mxu0 %v28
    %83 = vmatprep.subr.mxu0 0.0
    %84 = vmatpush2.msra.mxu0 0.0
    %85 = vmatprep.subr.mxu0 0.0
    %86 = vmatpush2.msra.mxu0 0.0
    %87 = vmatprep.subr.mxu0 0.0
    %88 = vmatpush2.msra.mxu0 0.0
    %89 = vmatprep.subr.mxu0 0.0
    %90 = vmatpush2.msra.mxu0 0.0
    %91 = vmatprep.subr.mxu0 0.0
    %92 = vmatpush2.msra.mxu0 0.0
    %93 = vmatprep.subr.mxu0 0.0
    %94 = vmatpush2.msra.mxu0 0.0
    %95 = vmatprep.subr.mxu0 0.0
    %96 = vmatpush2.msra.mxu0 0.0
    %97 = vmatprep.subr.mxu0 0.0
    %98 = vmatpush2.msra.mxu0 0.0
    %99 = vmatprep.subr.mxu0 0.0
    %100 = vmatpush2.msra.mxu0 0.0
    %101 = vmatprep.subr.mxu0 0.0
    %102 = vmatpush2.msra.mxu0 0.0
    %103 = vmatprep.subr.mxu0 0.0
    %104 = vmatpush2.msra.mxu0 0.0
    %105 = vmatprep.subr.mxu0 0.0
    %106 = vmatpush2.msra.mxu0 0.0
    %107 = vmatprep.subr.mxu0 0.0
    %108 = vmatpush2.msra.mxu0 0.0
    %109 = vmatprep.subr.mxu0 0.0
    %110 = vmatpush2.msra.mxu0 0.0
    %111 = vmatprep.subr.mxu0 0.0
    %112 = vmatpush2.msra.mxu0 0.0
    %113 = vmatprep.subr.mxu0 0.0
    %114 = vmatpush2.msra.mxu0 0.0
    %115 = vmatprep.mubr.f32.mxu0 0.0
    %116 = vmatmul.mubr.f32.gmra.mxu0 %v27
    %v117 = vpop.f32.mrf.mxu0
    %v118 = vadd.f32 %v49, %v117
    %v119 = vpop.f32.mrf.mxu0
    %120 = vdwg.mxu0
    %v121 = vmax.f32 %v118, 0.0
    %v122 = vld [vmem:[%s3] sm:$0xff]
    %v123 = vld [vmem:[%s3 + $0x8] sm:$0xff]
    %v124 = vld [vmem:[%s3 + $0x10] sm:$0xff]
    %v125 = vld [vmem:[%s3 + $0x18] sm:$0xff]
    %v126 = vld [vmem:[%s3 + $0x20] sm:$0xff]
    %v127 = vld [vmem:[%s3 + $0x28] sm:$0xff]
    %v128 = vld [vmem:[%s3 + $0x30] sm:$0xff]
    %v129 = vld [vmem:[%s3 + $0x38] sm:$0xff]
    %v130 = vld [vmem:[%s3 + $0x40] sm:$0xff]
    %v131 = vld [vmem:[%s3 + $0x48] sm:$0xff]
    %v132 = vld [vmem:[%s3 + $0x50] sm:$0xff]
    %v133 = vld [vmem:[%s3 + $0x58] sm:$0xff]
    %v134 = vld [vmem:[%s3 + $0x60] sm:$0xff]
    %v135 = vld [vmem:[%s3 + $0x68] sm:$0xff]
    %v136 = vld [vmem:[%s3 + $0x70] sm:$0xff]
    %v137 = vld [vmem:[%s3 + $0x78] sm:$0xff]
    %v138 = vld [vmem:[%s4] sm:$0x1]
    %v140 = vlaneseq
    %v141 = vshrl.u32 %v140, 7
    %v142 = vsub.s32 0, %v141
    %v143 = vrot.slane %v138, %v142
    %145 = vmatprep.subr.mxu0 0.0
    %146 = vmatpush1.msra.mxu0 %v137
    %147 = vmatprep.subr.mxu0 0.0
    %148 = vmatpush1.msra.mxu0 %v136
    %149 = vmatprep.subr.mxu0 0.0
    %150 = vmatpush1.msra.mxu0 %v135
    %151 = vmatprep.subr.mxu0 0.0
    %152 = vmatpush1.msra.mxu0 %v134
    %153 = vmatprep.subr.mxu0 0.0
    %154 = vmatpush1.msra.mxu0 %v133
    %155 = vmatprep.subr.mxu0 0.0
    %156 = vmatpush1.msra.mxu0 %v132
    %157 = vmatprep.subr.mxu0 0.0
    %158 = vmatpush1.msra.mxu0 %v131
    %159 = vmatprep.subr.mxu0 0.0
    %160 = vmatpush1.msra.mxu0 %v130
    %161 = vmatprep.subr.mxu0 0.0
    %162 = vmatpush1.msra.mxu0 %v129
    %163 = vmatprep.subr.mxu0 0.0
    %164 = vmatpush1.msra.mxu0 %v128
    %165 = vmatprep.subr.mxu0 0.0
    %166 = vmatpush1.msra.mxu0 %v127
    %167 = vmatprep.subr.mxu0 0.0
    %168 = vmatpush1.msra.mxu0 %v126
    %169 = vmatprep.subr.mxu0 0.0
    %170 = vmatpush1.msra.mxu0 %v125
    %171 = vmatprep.subr.mxu0 0.0
    %172 = vmatpush1.msra.mxu0 %v124
    %173 = vmatprep.subr.mxu0 0.0
    %174 = vmatpush1.msra.mxu0 %v123
    %175 = vmatprep.subr.mxu0 0.0
    %176 = vmatpush1.msra.mxu0 %v122
    %177 = vmatprep.subr.mxu0 0.0
    %178 = vmatpush2.msra.mxu0 0.0
    %179 = vmatprep.subr.mxu0 0.0
    %180 = vmatpush2.msra.mxu0 0.0
    %181 = vmatprep.subr.mxu0 0.0
    %182 = vmatpush2.msra.mxu0 0.0
    %183 = vmatprep.subr.mxu0 0.0
    %184 = vmatpush2.msra.mxu0 0.0
    %185 = vmatprep.subr.mxu0 0.0
    %186 = vmatpush2.msra.mxu0 0.0
    %187 = vmatprep.subr.mxu0 0.0
    %188 = vmatpush2.msra.mxu0 0.0
    %189 = vmatprep.subr.mxu0 0.0
    %190 = vmatpush2.msra.mxu0 0.0
    %191 = vmatprep.subr.mxu0 0.0
    %192 = vmatpush2.msra.mxu0 0.0
    %193 = vmatprep.subr.mxu0 0.0
    %194 = vmatpush2.msra.mxu0 0.0
    %195 = vmatprep.subr.mxu0 0.0
    %196 = vmatpush2.msra.mxu0 0.0
    %197 = vmatprep.subr.mxu0 0.0
    %198 = vmatpush2.msra.mxu0 0.0
    %199 = vmatprep.subr.mxu0 0.0
    %200 = vmatpush2.msra.mxu0 0.0
    %201 = vmatprep.subr.mxu0 0.0
    %202 = vmatpush2.msra.mxu0 0.0
    %203 = vmatprep.subr.mxu0 0.0
    %204 = vmatpush2.msra.mxu0 0.0
    %205 = vmatprep.subr.mxu0 0.0
    %206 = vmatpush2.msra.mxu0 0.0
    %207 = vmatprep.subr.mxu0 0.0
    %208 = vmatpush2.msra.mxu0 0.0
    %209 = vmatprep.mubr.f32.mxu0 0.0
    %210 = vmatmul.mubr.f32.gmra.mxu0 %v121
    %v211 = vpop.f32.mrf.mxu0
    %v212 = vadd.f32 %v143, %v211
    %v213 = vpop.f32.mrf.mxu0
    %214 = vdwg.mxu0
    %v215 = vmax.f32 %v212, 0.0
    %216 = vmatprep.subr.mxu0 0.0
    %217 = vmatpush1.msra.mxu0 %v137
    %218 = vmatprep.subr.mxu0 0.0
    %219 = vmatpush1.msra.mxu0 %v136
    %220 = vmatprep.subr.mxu0 0.0
    %221 = vmatpush1.msra.mxu0 %v135
    %222 = vmatprep.subr.mxu0 0.0
    %223 = vmatpush1.msra.mxu0 %v134
    %224 = vmatprep.subr.mxu0 0.0
    %225 = vmatpush1.msra.mxu0 %v133
    %226 = vmatprep.subr.mxu0 0.0
    %227 = vmatpush1.msra.mxu0 %v132
    %228 = vmatprep.subr.mxu0 0.0
    %229 = vmatpush1.msra.mxu0 %v131
    %230 = vmatprep.subr.mxu0 0.0
    %231 = vmatpush1.msra.mxu0 %v130
    %232 = vmatprep.subr.mxu0 0.0
    %233 = vmatpush1.msra.mxu0 %v129
    %234 = vmatprep.subr.mxu0 0.0
    %235 = vmatpush1.msra.mxu0 %v128
    %236 = vmatprep.subr.mxu0 0.0
    %237 = vmatpush1.msra.mxu0 %v127
    %238 = vmatprep.subr.mxu0 0.0
    %239 = vmatpush1.msra.mxu0 %v126
    %240 = vmatprep.subr.mxu0 0.0
    %241 = vmatpush1.msra.mxu0 %v125
    %242 = vmatprep.subr.mxu0 0.0
    %243 = vmatpush1.msra.mxu0 %v124
    %244 = vmatprep.subr.mxu0 0.0
    %245 = vmatpush1.msra.mxu0 %v123
    %246 = vmatprep.subr.mxu0 0.0
    %247 = vmatpush1.msra.mxu0 %v122
    %248 = vmatprep.subr.mxu0 0.0
    %249 = vmatpush2.msra.mxu0 0.0
    %250 = vmatprep.subr.mxu0 0.0
    %251 = vmatpush2.msra.mxu0 0.0
    %252 = vmatprep.subr.mxu0 0.0
    %253 = vmatpush2.msra.mxu0 0.0
    %254 = vmatprep.subr.mxu0 0.0
    %255 = vmatpush2.msra.mxu0 0.0
    %256 = vmatprep.subr.mxu0 0.0
    %257 = vmatpush2.msra.mxu0 0.0
    %258 = vmatprep.subr.mxu0 0.0
    %259 = vmatpush2.msra.mxu0 0.0
    %260 = vmatprep.subr.mxu0 0.0
    %261 = vmatpush2.msra.mxu0 0.0
    %262 = vmatprep.subr.mxu0 0.0
    %263 = vmatpush2.msra.mxu0 0.0
    %264 = vmatprep.subr.mxu0 0.0
    %265 = vmatpush2.msra.mxu0 0.0
    %266 = vmatprep.subr.mxu0 0.0
    %267 = vmatpush2.msra.mxu0 0.0
    %268 = vmatprep.subr.mxu0 0.0
    %269 = vmatpush2.msra.mxu0 0.0
    %270 = vmatprep.subr.mxu0 0.0
    %271 = vmatpush2.msra.mxu0 0.0
    %272 = vmatprep.subr.mxu0 0.0
    %273 = vmatpush2.msra.mxu0 0.0
    %274 = vmatprep.subr.mxu0 0.0
    %275 = vmatpush2.msra.mxu0 0.0
    %276 = vmatprep.subr.mxu0 0.0
    %277 = vmatpush2.msra.mxu0 0.0
    %278 = vmatprep.subr.mxu0 0.0
    %279 = vmatpush2.msra.mxu0 0.0
    %280 = vmatprep.mubr.f32.mxu0 0.0
    %281 = vmatmul.mubr.f32.gmra.mxu0 %v215
    %v282 = vpop.f32.mrf.mxu0
    %v283 = vadd.f32 %v143, %v282
    %v284 = vpop.f32.mrf.mxu0
    %285 = vdwg.mxu0
    %v286 = vmax.f32 %v283, 0.0
    %v287 = vld [vmem:[%s5] sm:$0xff]
    %v288 = vld [vmem:[%s5 + $0x8] sm:$0xff]
    %v289 = vld [vmem:[%s5 + $0x10] sm:$0xff]
    %v290 = vld [vmem:[%s5 + $0x18] sm:$0xff]
    %v291 = vld [vmem:[%s5 + $0x20] sm:$0xff]
    %v292 = vld [vmem:[%s5 + $0x28] sm:$0xff]
    %v293 = vld [vmem:[%s5 + $0x30] sm:$0xff]
    %v294 = vld [vmem:[%s5 + $0x38] sm:$0xff]
    %v295 = vld [vmem:[%s5 + $0x40] sm:$0xff]
    %v296 = vld [vmem:[%s5 + $0x48] sm:$0xff]
    %v297 = vld [vmem:[%s5 + $0x50] sm:$0xff]
    %v298 = vld [vmem:[%s5 + $0x58] sm:$0xff]
    %v299 = vld [vmem:[%s5 + $0x60] sm:$0xff]
    %v300 = vld [vmem:[%s5 + $0x68] sm:$0xff]
    %v301 = vld [vmem:[%s5 + $0x70] sm:$0xff]
    %v302 = vld [vmem:[%s5 + $0x78] sm:$0xff]
    %v303 = vld [vmem:[%s6] sm:$0x1]
    %v305 = vlaneseq
    %v306 = vshrl.u32 %v305, 7
    %v307 = vsub.s32 0, %v306
    %v308 = vrot.slane %v303, %v307
    %310 = vmatprep.subr.mxu0 0.0
    %311 = vmatpush1.msra.mxu0 %v302
    %312 = vmatprep.subr.mxu0 0.0
    %313 = vmatpush1.msra.mxu0 %v301
    %314 = vmatprep.subr.mxu0 0.0
    %315 = vmatpush1.msra.mxu0 %v300
    %316 = vmatprep.subr.mxu0 0.0
    %317 = vmatpush1.msra.mxu0 %v299
    %318 = vmatprep.subr.mxu0 0.0
    %319 = vmatpush1.msra.mxu0 %v298
    %320 = vmatprep.subr.mxu0 0.0
    %321 = vmatpush1.msra.mxu0 %v297
    %322 = vmatprep.subr.mxu0 0.0
    %323 = vmatpush1.msra.mxu0 %v296
    %324 = vmatprep.subr.mxu0 0.0
    %325 = vmatpush1.msra.mxu0 %v295
    %326 = vmatprep.subr.mxu0 0.0
    %327 = vmatpush1.msra.mxu0 %v294
    %328 = vmatprep.subr.mxu0 0.0
    %329 = vmatpush1.msra.mxu0 %v293
    %330 = vmatprep.subr.mxu0 0.0
    %331 = vmatpush1.msra.mxu0 %v292
    %332 = vmatprep.subr.mxu0 0.0
    %333 = vmatpush1.msra.mxu0 %v291
    %334 = vmatprep.subr.mxu0 0.0
    %335 = vmatpush1.msra.mxu0 %v290
    %336 = vmatprep.subr.mxu0 0.0
    %337 = vmatpush1.msra.mxu0 %v289
    %338 = vmatprep.subr.mxu0 0.0
    %339 = vmatpush1.msra.mxu0 %v288
    %340 = vmatprep.subr.mxu0 0.0
    %341 = vmatpush1.msra.mxu0 %v287
    %342 = vmatprep.subr.mxu0 0.0
    %343 = vmatpush2.msra.mxu0 0.0
    %344 = vmatprep.subr.mxu0 0.0
    %345 = vmatpush2.msra.mxu0 0.0
    %346 = vmatprep.subr.mxu0 0.0
    %347 = vmatpush2.msra.mxu0 0.0
    %348 = vmatprep.subr.mxu0 0.0
    %349 = vmatpush2.msra.mxu0 0.0
    %350 = vmatprep.subr.mxu0 0.0
    %351 = vmatpush2.msra.mxu0 0.0
    %352 = vmatprep.subr.mxu0 0.0
    %353 = vmatpush2.msra.mxu0 0.0
    %354 = vmatprep.subr.mxu0 0.0
    %355 = vmatpush2.msra.mxu0 0.0
    %356 = vmatprep.subr.mxu0 0.0
    %357 = vmatpush2.msra.mxu0 0.0
    %358 = vmatprep.subr.mxu0 0.0
    %359 = vmatpush2.msra.mxu0 0.0
    %360 = vmatprep.subr.mxu0 0.0
    %361 = vmatpush2.msra.mxu0 0.0
    %362 = vmatprep.subr.mxu0 0.0
    %363 = vmatpush2.msra.mxu0 0.0
    %364 = vmatprep.subr.mxu0 0.0
    %365 = vmatpush2.msra.mxu0 0.0
    %366 = vmatprep.subr.mxu0 0.0
    %367 = vmatpush2.msra.mxu0 0.0
    %368 = vmatprep.subr.mxu0 0.0
    %369 = vmatpush2.msra.mxu0 0.0
    %370 = vmatprep.subr.mxu0 0.0
    %371 = vmatpush2.msra.mxu0 0.0
    %372 = vmatprep.subr.mxu0 0.0
    %373 = vmatpush2.msra.mxu0 0.0
    %374 = vmatprep.mubr.f32.mxu0 0.0
    %375 = vmatmul.mubr.f32.gmra.mxu0 %v286
    %v376 = vpop.f32.mrf.mxu0
    %v377 = vadd.f32 %v308, %v376
    %v378 = vpop.f32.mrf.mxu0
    %379 = vdwg.mxu0
    %380 = vst [vmem:[#allocation2] sm:$0xff] %v377
    // Predicated region
    $region30: #{p2s_forward.1} parent=1 // pred_check
      _
    $region31: #{p2s_forward.1} parent=1 // pred_check_branch
      %382 = sbr.rel (0) target = $region33
    $region32: #{p2s_forward.1} parent=1 // pred_region
      %s384 = ssub.s32 128, 128
      %385 = vsyncadd [#allocation3], %s384
      %s387 = sshll.u32 [#allocation2], 4
      %s388 = int_to_ptr.vmem [resolvable:$true] %s387
      %390 = dma.vmem_to_hbm [thread:$0]  %s388, 128, %s7, [#allocation3]
    $region33: #{p2s_forward.1} parent=1 // pred_fallthru
      _
    // Predicated region
    $region34: #{p2s_forward.1} parent=1 // pred_check
      _
    $region35: #{p2s_forward.1} parent=1 // pred_check_branch
      %392 = sbr.rel (0) target = $region37
    $region36: #{p2s_forward.1} parent=1 // pred_region
      %393 = dma.done [#allocation3], 128
    $region37: #{p2s_forward.1} parent=1 // pred_fallthru
      _
    %394 = vsyncpa [#allocation3], 1

</llo_original>
